<compile_context>
chip_gen: v6e
topology: v6e:2x2x1
jax: 0.10.0
libtpu: 0.0.40
codegen_flags: <defaults>
</compile_context>

<pallas_src>
import functools

import jax
import jax.numpy as jnp
from jax import lax
from jax.experimental import pallas as pl
from jax.experimental.pallas import tpu as pltpu

_LANE = 128


def _round_up(a: int, b: int) -> int:
    return ((a + b - 1) // b) * b


def _tpu_generation() -> str:
    """Best-effort TPU generation detection (used only for perf policy)."""
    try:
        kind = jax.devices()[0].device_kind.lower()
    except Exception:
        return "unknown"
    if "v5 lite" in kind or "v5lite" in kind or "v5e" in kind:
        return "v5e"
    if "v6" in kind:
        return "v6e"
    if "v7" in kind:
        return "v7x"
    if "v4" in kind or "v5" in kind:
        return "v5p"  # 128 MiB-VMEM class
    return "unknown"


def _gem_pow_sum_kernel(x_ref, o_ref, *, pooling_param, hw, tile_hw,
                        mask_tail, compute_dtype):
    """Accumulates sum_over_HW(clamp(x, 1e-6) ** p) per row into o_ref (f32)."""
    k = pl.program_id(1)  # reduction (H*W) grid axis

    @pl.when(k == 0)
    def _init():
        o_ref[...] = jnp.zeros_like(o_ref)

    x = x_ref[...]
    if x.dtype != compute_dtype:
        x = x.astype(compute_dtype)
    x = jnp.maximum(x, jnp.asarray(1e-6, dtype=x.dtype))   # clamp(min=1e-6)

    p_int = int(pooling_param)
    if float(p_int) == float(pooling_param) and p_int >= 1:
        xp = lax.integer_pow(x, p_int)                      # p=3 -> x*x*x (VPU)
    else:
        xp = jnp.power(x.astype(jnp.float32), pooling_param)  # EUP fallback

    if mask_tail:  # partial last H*W block: zero out-of-range columns
        col = k * tile_hw + lax.broadcasted_iota(jnp.int32, xp.shape, 1)
        xp = jnp.where(col < hw, xp, jnp.zeros_like(xp))

    # f32 accumulation regardless of the compute dtype.
    o_ref[...] += jnp.sum(xp.astype(jnp.float32), axis=-1, keepdims=True)


def global_gem_pool2d(x: jax.Array, pooling_param: float = 3.0) -> jax.Array:
    """GeM pooling. x: (N, C, H, W) -> (N, C), dtype = x.dtype."""
    N, C, H, W = x.shape
    HW = H * W
    rows = N * C
    x2 = x.reshape(rows, HW)                  # stream in native dtype

    itemsize = x2.dtype.itemsize
    sublane = max(8, 32 // itemsize)          # 8 (4B) / 16 (2B) / 32 (1B)

    gen = _tpu_generation()
    if gen in ("v5e", "v6e", "v5p"):          # 128 MiB VMEM per TensorCore
        vmem_budget = 44 * 1024 * 1024
        vmem_limit = 64 * 1024 * 1024
    else:                                     # v7x (64 MiB VMEM) or unknown
        vmem_budget = 22 * 1024 * 1024
        vmem_limit = 36 * 1024 * 1024

    # bf16 arithmetic only where the VPU has bf16 ALUs (v6e / v7x); v5e and
    # f32 inputs keep the f32 compute path.
    if x2.dtype == jnp.bfloat16 and gen in ("v6e", "v7x"):
        compute_dtype = jnp.bfloat16
    else:
        compute_dtype = jnp.float32
    compute_itemsize = jnp.dtype(compute_dtype).itemsize

    # ---- Byte-based tile sizing (includes lane padding to 128) -------------
    # Per data lane: double-buffered native-dtype input stream + ~3 full-tile
    # elementwise temporaries (clamp / pow / f32 cast chain) in compute dtype.
    bytes_per_lane = 2 * itemsize + 3 * compute_itemsize
    # Double-buffered (tile_r, 1) f32 output column pads to 128 lanes in VMEM.
    out_bytes_per_row = 2 * _LANE * 4

    def _tile_r_for(hw_lanes: int) -> int:
        per_row = hw_lanes * bytes_per_lane + out_bytes_per_row
        tr = max(sublane, (vmem_budget // per_row) // sublane * sublane)
        return min(tr, _round_up(rows, sublane))

    hw_lanes_full = _round_up(HW, _LANE)
    fits_full_hw = ((hw_lanes_full * bytes_per_lane + out_bytes_per_row)
                    * sublane) <= vmem_budget
    if fits_full_hw:
        tile_hw, grid_hw, mask_tail = HW, 1, False
        tile_r = _tile_r_for(hw_lanes_full)
    else:
        # Split H*W across a second ("arbitrary") reduction grid axis.
        tile_hw = (vmem_budget // sublane - out_bytes_per_row) // bytes_per_lane
        tile_hw = max(_LANE, (tile_hw // _LANE) * _LANE)
        grid_hw = pl.cdiv(HW, tile_hw)
        mask_tail = (HW % tile_hw) != 0
        tile_r = _tile_r_for(tile_hw)

    grid_r = pl.cdiv(rows, tile_r)

    kernel = functools.partial(
        _gem_pow_sum_kernel,
        pooling_param=float(pooling_param), hw=HW, tile_hw=tile_hw,
        mask_tail=mask_tail, compute_dtype=compute_dtype)

    is_int_p = float(int(pooling_param)) == float(pooling_param)
    flops = 4 * rows * HW
    transcendentals = 0 if is_int_p else 2 * rows * HW
    bytes_accessed = rows * HW * itemsize + rows * 4

    sums = pl.pallas_call(
        kernel,
        out_shape=jax.ShapeDtypeStruct((rows, 1), jnp.float32),
        grid_spec=pltpu.PrefetchScalarGridSpec(
            num_scalar_prefetch=0,
            grid=(grid_r, grid_hw),
            in_specs=[pl.BlockSpec((tile_r, tile_hw), lambda i, k: (i, k))],
            out_specs=pl.BlockSpec((tile_r, 1), lambda i, k: (i, 0)),
        ),
        compiler_params=pltpu.CompilerParams(
            dimension_semantics=("parallel", "arbitrary"),
            vmem_limit_bytes=vmem_limit,
        ),
        cost_estimate=pl.CostEstimate(
            flops=flops,
            transcendentals=transcendentals,
            bytes_accessed=bytes_accessed,
        ),
    )(x2)

    # Hoisted epilogue: mean + 1/p root + dtype cast on the tiny (N*C,) result.
    mean = sums[:, 0] * (1.0 / HW)
    out = jnp.power(mean, 1.0 / float(pooling_param))
    return out.astype(x.dtype).reshape(N, C)


if __name__ == "__main__":
    # Deterministic synthetic input (GeM expects non-negative inputs).
    key = jax.random.PRNGKey(0)
    N, C, H, W = 2, 4, 16, 16
    x = jax.random.uniform(key, (N, C, H, W), dtype=jnp.float32)

    pooling_param = 3.0  # deterministic "init" of the module's constructor arg

    y = global_gem_pool2d(x, pooling_param)
    y = jax.block_until_ready(y)

    # Pure-JAX reference of the exact PyTorch semantics.
    xr = x.reshape(N, C, H * W)
    ref = jnp.power(
        jnp.mean(jnp.power(jnp.maximum(xr, 1e-6), pooling_param), axis=2),
        1.0 / pooling_param,
    )
    assert y.shape == (N, C)
    assert y.dtype == x.dtype
    assert jnp.allclose(y, ref, atol=1e-5, rtol=1e-5), (y, ref)

    print("KERNEL_OK")
</pallas_src>

<mosaic_0001>
module attributes {stable_mosaic.version = 11 : i64} {
  func.func @_gem_pow_sum_kernel(%arg0: i32, %arg1: i32, %arg2: memref<8x256xf32, #tpu.memory_space<vmem>>, %arg3: memref<8x1xf32, #tpu.memory_space<vmem>>) attributes {dimension_semantics = [#tpu.dimension_semantics<parallel>, #tpu.dimension_semantics<arbitrary>], iteration_bounds = array<i64: 1, 1>, scalar_prefetch = 0 : i64, scratch_operands = 0 : i64, tpu.core_type = #tpu.core_type<tc>, window_params = [{transform_indices = @transform_0, window_bounds = array<i64: 8, 256>}, {transform_indices = @transform_1, window_bounds = array<i64: 8, 1>}]} {
    %c0_i32 = arith.constant 0 : i32
    %0 = arith.cmpi eq, %arg1, %c0_i32 : i32
    %1 = arith.extui %0 : i1 to i32
    %c0_i32_0 = arith.constant 0 : i32
    %2 = arith.cmpi ne, %1, %c0_i32_0 : i32
    scf.if %2 {
      %cst_7 = arith.constant 0.000000e+00 : f32
      %13 = vector.broadcast %cst_7 : f32 to vector<8x1xf32>
      %c0_8 = arith.constant 0 : index
      %c0_9 = arith.constant 0 : index
      %14 = vector.load %arg3[%c0_8, %c0_9] : memref<8x1xf32, #tpu.memory_space<vmem>>, vector<8x1xf32>
      tpu.vector_store %arg3[%c0_8, %c0_9], %13 {strides = array<i32>} : memref<8x1xf32, #tpu.memory_space<vmem>>, vector<8x1xf32>,
    } else {
    }
    %c0 = arith.constant 0 : index
    %c0_1 = arith.constant 0 : index
    %3 = vector.load %arg2[%c0, %c0_1] : memref<8x256xf32, #tpu.memory_space<vmem>>, vector<8x256xf32>
    %cst = arith.constant 9.99999997E-7 : f32
    %4 = vector.broadcast %cst : f32 to vector<8x256xf32>
    %5 = arith.maximumf %3, %4 : vector<8x256xf32>
    %6 = arith.mulf %5, %5 : vector<8x256xf32>
    %7 = arith.mulf %5, %6 : vector<8x256xf32>
    %c0_2 = arith.constant 0 : index
    %c0_3 = arith.constant 0 : index
    %8 = vector.load %arg3[%c0_2, %c0_3] : memref<8x1xf32, #tpu.memory_space<vmem>>, vector<8x1xf32>
    %cst_4 = arith.constant dense<0.000000e+00> : vector<8xf32>
    %9 = vector.multi_reduction <add>, %7, %cst_4 [1] : vector<8x256xf32> to vector<8xf32>
    %10 = vector.shape_cast %9 : vector<8xf32> to vector<8x1xf32>
    %11 = arith.addf %8, %10 : vector<8x1xf32>
    %c0_5 = arith.constant 0 : index
    %c0_6 = arith.constant 0 : index
    %12 = vector.load %arg3[%c0_5, %c0_6] : memref<8x1xf32, #tpu.memory_space<vmem>>, vector<8x1xf32>
    tpu.vector_store %arg3[%c0_5, %c0_6], %11 {strides = array<i32>} : memref<8x1xf32, #tpu.memory_space<vmem>>, vector<8x1xf32>,
    return
  }
  func.func @transform_0(%arg0: i32, %arg1: i32) -> (i32, i32) {
    %c0_i32 = arith.constant 0 : i32
    return %arg0, %arg1 : i32, i32
  }
  func.func @transform_1(%arg0: i32, %arg1: i32) -> (i32, i32) {
    %c0_i32 = arith.constant 0 : i32
    %c0_i32_0 = arith.constant 0 : i32
    return %arg0, %c0_i32 : i32, i32
  }
}

</mosaic_0001>

<llo_original>
// kernel: tpu_custom_call.1
$region0: #{tpu_custom_call.1}
  #allocation0 [shape = 'u32[]', space=smem, size = 0x4, offset = 0x4, fixed_abs, tag = 'smem constant byte address 0x4 - core index']
  #allocation1 [shape = 'u32[144,128]{1,0:T(1,128)}', space=vmem, size = 0x12000, scoped, tag = 'internal scratch']
  %s0 = inlined_call_operand.hbm [shape: f32[8,256], index: 0, kind: input, shape index: {}]
  %s1 = inlined_call_operand.vmem [shape: f32[8,1], index: 1, kind: output, shape index: {}]
  %s2 = sld [smem:[#allocation0]]
  $region22: #{tpu_custom_call.1} parent=0
    _
  %s4 = ssub.s32 1, %s2
  %s5 = scalar_select 0, %s4, %s2
  $region1: #{tpu_custom_call.1} parent=0
    #allocation2 [shape = 'u8[8192]{0}', space=vmem, size = 0x2000, scoped, tag = 'input window, operand 0, single buffered']
    #allocation3 [shape = 's32[1]{0}', space=sflag, size = 0x4, scoped, tag = 'scoped memory for tpu_custom_call.1']
    %6 = vsyncpa [#allocation3], 0
    // Predicated region
    $region2: #{tpu_custom_call.1} parent=1 // pred_check
      _
    $region3: #{tpu_custom_call.1} parent=1 // pred_check_branch
      %8 = sbr.rel (0) target = $region5
    $region4: #{tpu_custom_call.1} parent=1 // pred_region
      %s10 = ssub.s32 256, 256
      %11 = vsyncadd [#allocation3], %s10
      %s13 = sshll.u32 [#allocation2], 4
      %s14 = int_to_ptr.vmem [resolvable:$true] %s13
      %16 = dma.hbm_to_vmem [thread:$0]  %s0, 256, %s14, [#allocation3]
    $region5: #{tpu_custom_call.1} parent=1 // pred_fallthru
      _
    // Predicated region
    $region6: #{tpu_custom_call.1} parent=1 // pred_check
      _
    $region7: #{tpu_custom_call.1} parent=1 // pred_check_branch
      %18 = sbr.rel (0) target = $region9
    $region8: #{tpu_custom_call.1} parent=1 // pred_region
      %19 = dma.done [#allocation3], 256
    $region9: #{tpu_custom_call.1} parent=1 // pred_fallthru
      _
    %p20 = scmp.eq.s32.totalorder 0, 0
    // Predicated region
    $region10: #{tpu_custom_call.1} parent=1 // pred_check
      %p21 = pneg %p20
    $region11: #{tpu_custom_call.1} parent=1 // pred_check_branch
      %23 = sbr.rel (%p21) target = $region13
    $region12: #{tpu_custom_call.1} parent=1 // pred_region
      %vm24 = vcmask 7168
      %25 = vst.msk [vmem:[%s1] sm:$0xff] %vm24, 0.0
    $region13: #{tpu_custom_call.1} parent=1 // pred_fallthru
      _
    %v26 = vld [vmem:[#allocation2] sm:$0xff]
    %v27 = vld [vmem:[#allocation2 + $0x8] sm:$0xff]
    %v28 = vmax.f32 %v26, 1e-06
    %v29 = vmax.f32 %v27, 1e-06
    %v30 = vmul.f32 %v28, %v28
    %v31 = vmul.f32 %v29, %v29
    %v32 = vmul.f32 %v28, %v30
    %v33 = vmul.f32 %v29, %v31
    %v34 = vld [vmem:[%s1] sm:$0xff]
    %v35 = vadd.f32 %v32, %v33
    %36 = vadd.xlane.f32.xlu0 %v35
    %v37 = vpop.xlane.xlu0 %36
    %v38 = vadd.f32 %v34, %v37
    %vm39 = vcmask 7168
    %40 = vst.msk [vmem:[%s1] sm:$0xff] %vm39, %v38
    // Predicated region
    $region14: #{tpu_custom_call.1} parent=1 // pred_check
      _
    $region15: #{tpu_custom_call.1} parent=1 // pred_check_branch
      %42 = sbr.rel (0) target = $region17
    $region16: #{tpu_custom_call.1} parent=1 // pred_region
      _
    $region17: #{tpu_custom_call.1} parent=1 // pred_fallthru
      _
    // Predicated region
    $region18: #{tpu_custom_call.1} parent=1 // pred_check
      _
    $region19: #{tpu_custom_call.1} parent=1 // pred_check_branch
      %44 = sbr.rel (0) target = $region21
    $region20: #{tpu_custom_call.1} parent=1 // pred_region
      _
    $region21: #{tpu_custom_call.1} parent=1 // pred_fallthru
      _
    %45 = vsyncpa [#allocation3], 1

</llo_original>
